<compile_context>
chip_gen: v6e
topology: v6e:2x2x1
jax: 0.10.0
libtpu: 0.0.40
codegen_flags: <defaults>
</compile_context>

<pallas_src>
import functools
import math

import jax
import jax.numpy as jnp
from jax.experimental import pallas as pl
from jax.experimental.pallas import tpu as pltpu


def _round_up(x, m):
    return (x + m - 1) // m * m


@functools.lru_cache(maxsize=None)
def _vmem_limit_bytes():
    """Generation-aware VMEM cap: ~48 MiB on v7x (64 MiB physical), 96 MiB on
    v5e/v6e (128 MiB physical); always leaves headroom for compiler scratch."""
    cap = 64 * 1024 * 1024
    try:
        info = pltpu.get_tpu_info()
        cap = int(getattr(info, "vmem_capacity_bytes", cap) or cap)
    except Exception:
        pass
    return int(max(32 * 1024 * 1024,
                   min(cap - 16 * 1024 * 1024, 96 * 1024 * 1024)))


# ----------------------------- Pallas kernels ------------------------------ #

def _sage_layer_kernel(adj_ref, xsrc_ref, xdst_ref, invdeg_ref, wl_ref, bl_ref,
                       wr_ref, *refs, apply_relu, folded, emit_log_softmax):
    """One bipartite SAGEConv layer (mean aggregation + root weight + bias).

    Grid = (n_dst_tiles, n_src_tiles).  The second (reduction) axis accumulates
    adj @ x_src into VMEM scratch; the precomputed 1/deg normalization, linear
    transforms, bias, ReLU and (optionally) log_softmax are applied in the
    epilogue on the last reduction step.  adj is streamed as int8 and cast to
    f32 on the VPU (free filler under the memory bound).
    """
    if emit_log_softmax:
        out_ref, logsm_ref, acc_ref = refs
    else:
        out_ref, acc_ref = refs
        logsm_ref = None

    k = pl.program_id(1)

    @pl.when(k == 0)
    def _init():
        acc_ref[...] = jnp.zeros_like(acc_ref)

    adj = adj_ref[...].astype(jnp.float32)          # int8 -> f32 cast (VPU)
    acc_ref[...] += jnp.dot(adj, xsrc_ref[...],
                            preferred_element_type=jnp.float32)

    @pl.when(k == pl.num_programs(1) - 1)
    def _finalize():
        agg = acc_ref[...] * invdeg_ref[...]        # mean aggregation
        if not folded:
            agg = jnp.dot(agg, wl_ref[...], preferred_element_type=jnp.float32)
        h = agg + bl_ref[...] + jnp.dot(xdst_ref[...], wr_ref[...],
                                        preferred_element_type=jnp.float32)
        if apply_relu:
            h = jnp.maximum(h, 0.0)
        # Dropout(p=0.5, training=False) is the identity in eval mode.
        out_ref[...] = h.astype(out_ref.dtype)
        if emit_log_softmax:
            m = jnp.max(h, axis=-1, keepdims=True)
            s = h - m
            lse = jnp.log(jnp.sum(jnp.exp(s), axis=-1, keepdims=True))
            logsm_ref[...] = (s - lse).astype(logsm_ref.dtype)


def _zzT_kernel(zrow_ref, zcol_ref, out_ref):
    # InnerProductDecoder tile: contract the feature dim of the two z tiles
    # ('id,jd->ij'); identity activation; output may be bf16 (write-bound).
    out_ref[...] = jax.lax.dot_general(
        zrow_ref[...], zcol_ref[...],
        dimension_numbers=(((1,), (1,)), ((), ())),
        preferred_element_type=jnp.float32).astype(out_ref.dtype)


# ------------------------------ wrappers ----------------------------------- #

def sage_layer(edge_index, x_src, x_dst, w_l, b_l, w_r, *, apply_relu,
               emit_log_softmax, tm=1024, tk=4096):
    """One SAGEConv layer.  Weights are pre-transposed to (in, out)."""
    n_src = x_src.shape[0]
    n_dst = x_dst.shape[0]
    c_in, c_out = w_l.shape

    folded = c_out < c_in
    if folded:
        # Hoisted fold: adj @ (x @ W) == (adj @ x) @ W.  Contract the features
        # ONCE up front so the big adjacency matmul streams width-c_out
        # activations and never redoes this per dst-tile pass.
        x_stream = jnp.dot(x_src, w_l, precision=jax.lax.Precision.HIGHEST)
    else:
        x_stream = x_src
    c_eff = x_stream.shape[1]

    # Tile selection:
    #  * TM aligned to 32 (int8 sublane packing of the adj tile) and capped at
    #    ~n_dst/2 so the "parallel" axis has >=2 tiles (2 TensorCores on v7x).
    #  * TK aligned to 128 lanes.
    half = _round_up(max(1, (n_dst + 1) // 2), 32)
    TM = max(32, min(tm, half))
    TK = max(128, min(tk, _round_up(n_src, 128)))
    M = _round_up(n_dst, TM)
    K = _round_up(n_src, TK)

    # Dense edge-count matrix streamed as int8 (raw counts; the 1/deg
    # normalization uses precomputed degrees below, so the dense matrix hits
    # HBM exactly once and at 1 byte/element).
    # TODO(synk): duplicate-edge multiplicities > 127 would be clamped here;
    # keep bf16 counts if sampled graphs can contain such multiplicities.
    # TODO(synk): for true big-data graphs keep edge_index sparse (CSR) and
    # gather source rows via PrefetchScalarGridSpec / manual DMA instead of a
    # dense count matrix.
    src, dst = edge_index[0], edge_index[1]
    counts = jnp.zeros((M, K), jnp.int32).at[dst, src].add(1)
    adj = jnp.minimum(counts, 127).astype(jnp.int8)

    # Precomputed in-degrees and clamped reciprocal (O(E) scatter, no per-tile
    # cross-lane reduce and no divide inside the kernel epilogue).
    deg = jnp.zeros((M,), jnp.float32).at[dst].add(1.0)
    inv_deg = (1.0 / jnp.maximum(deg, 1.0)).reshape(M, 1)

    xs = jnp.zeros((K, c_eff), jnp.float32).at[:n_src].set(
        x_stream.astype(jnp.float32))
    xd = jnp.zeros((M, c_in), jnp.float32).at[:n_dst].set(
        x_dst.astype(jnp.float32))

    grid = (M // TM, K // TK)
    in_specs = [
        pl.BlockSpec((TM, TK), lambda i, k: (i, k)),        # int8 edge counts
        pl.BlockSpec((TK, c_eff), lambda i, k: (k, 0)),     # (folded) x_src
        pl.BlockSpec((TM, c_in), lambda i, k: (i, 0)),      # x_dst (root path)
        pl.BlockSpec((TM, 1), lambda i, k: (i, 0)),         # precomputed 1/deg
        pl.BlockSpec((c_in, c_out), lambda i, k: (0, 0)),   # w_l (resident)
        pl.BlockSpec((1, c_out), lambda i, k: (0, 0)),      # b_l (resident)
        pl.BlockSpec((c_in, c_out), lambda i, k: (0, 0)),   # w_r (resident)
    ]
    out_spec = pl.BlockSpec((TM, c_out), lambda i, k: (i, 0))
    if emit_log_softmax:
        out_shape = (jax.ShapeDtypeStruct((M, c_out), jnp.float32),
                     jax.ShapeDtypeStruct((M, c_out), jnp.float32))
        out_specs = (out_spec, out_spec)
    else:
        out_shape = jax.ShapeDtypeStruct((M, c_out), jnp.float32)
        out_specs = out_spec

    n_row_passes = M // TM
    flops = 2 * M * K * c_eff + 2 * M * c_in * c_out
    if not folded:
        flops += 2 * M * c_in * c_out
    bytes_accessed = (M * K                                    # int8 adj
                      + 4 * n_row_passes * K * c_eff           # x_src restream
                      + 4 * M * c_in                           # x_dst
                      + 4 * M                                  # inv_deg
                      + 4 * (2 * c_in * c_out + c_out)         # weights + bias
                      + 4 * M * c_out * (2 if emit_log_softmax else 1))
    cost = pl.CostEstimate(
        flops=int(flops),
        transcendentals=int(M * c_out if emit_log_softmax else 0),
        bytes_accessed=int(bytes_accessed))

    result = pl.pallas_call(
        functools.partial(_sage_layer_kernel, apply_relu=apply_relu,
                          folded=folded, emit_log_softmax=emit_log_softmax),
        out_shape=out_shape,
        grid_spec=pltpu.PrefetchScalarGridSpec(
            num_scalar_prefetch=0, grid=grid,
            in_specs=in_specs, out_specs=out_specs,
            scratch_shapes=[pltpu.VMEM((TM, c_eff), jnp.float32)]),
        compiler_params=pltpu.CompilerParams(
            dimension_semantics=("parallel", "arbitrary"),
            vmem_limit_bytes=_vmem_limit_bytes()),
        cost_estimate=cost,
    )(adj, xs, xd, inv_deg, w_l, b_l, w_r)

    if emit_log_softmax:
        h, logsm = result
        return h[:n_dst], logsm[:n_dst]
    return result[:n_dst]


def inner_product_decode(z, *, out_dtype=jnp.bfloat16, tm=512, tn=1024):
    """InnerProductDecoder: z @ z.T, tiled over a 2-D output grid.

    Output is emitted in `out_dtype` (bf16 by default) since the kernel is
    write-bound on the n^2 result; TN stays a lane-dense multiple of 128.
    """
    n, c = z.shape
    TM = min(tm, _round_up(n, 16))          # 16-row alignment covers f32/bf16
    TN = min(tn, _round_up(n, 128))
    M = _round_up(n, TM * TN // math.gcd(TM, TN))
    zp = jnp.zeros((M, c), jnp.float32).at[:n].set(z.astype(jnp.float32))

    grid = (M // TM, M // TN)
    itemsize = jnp.dtype(out_dtype).itemsize
    cost = pl.CostEstimate(
        flops=int(2 * M * M * c), transcendentals=0,
        bytes_accessed=int(4 * M * c + 4 * (M // TM) * M * c
                           + itemsize * M * M))
    prod = pl.pallas_call(
        _zzT_kernel,
        out_shape=jax.ShapeDtypeStruct((M, M), out_dtype),
        grid_spec=pltpu.PrefetchScalarGridSpec(
            num_scalar_prefetch=0, grid=grid,
            in_specs=[pl.BlockSpec((TM, c), lambda i, j: (i, 0)),
                      pl.BlockSpec((TN, c), lambda i, j: (j, 0))],
            out_specs=pl.BlockSpec((TM, TN), lambda i, j: (i, j))),
        compiler_params=pltpu.CompilerParams(
            dimension_semantics=("parallel", "parallel"),
            vmem_limit_bytes=_vmem_limit_bytes()),
        cost_estimate=cost,
    )(zp, zp)
    return prod[:n, :n]


def sage_forward(params, x, adjs):
    """params['convs'][i] = dict(w_l=(in,out), b_l=(1,out), w_r=(in,out))."""
    num_layers = len(params["convs"])
    log_probs = None
    for i, (edge_index, size) in enumerate(adjs):
        _, n_dst = size
        x_target = x[:n_dst]
        conv = params["convs"][i]
        if i == num_layers - 1:
            # Fuse the decode-side log_softmax into the final layer epilogue.
            x, log_probs = sage_layer(edge_index, x, x_target,
                                      conv["w_l"], conv["b_l"], conv["w_r"],
                                      apply_relu=False, emit_log_softmax=True)
        else:
            x = sage_layer(edge_index, x, x_target,
                           conv["w_l"], conv["b_l"], conv["w_r"],
                           apply_relu=True, emit_log_softmax=False)
    x_product = inner_product_decode(x)
    return log_probs, x_product


# ------------------------- pure-JAX reference ------------------------------ #

def sage_forward_ref(params, x, adjs):
    hp = jax.lax.Precision.HIGHEST
    num_layers = len(params["convs"])
    for i, (edge_index, size) in enumerate(adjs):
        n_src, n_dst = size
        x_target = x[:n_dst]
        src, dst = edge_index[0], edge_index[1]
        counts = jnp.zeros((n_dst, n_src), jnp.float32).at[dst, src].add(1.0)
        deg = jnp.maximum(jnp.sum(counts, axis=1, keepdims=True), 1.0)
        conv = params["convs"][i]
        agg = jnp.dot(counts, x, precision=hp) / deg
        h = jnp.dot(agg, conv["w_l"], precision=hp) + conv["b_l"]
        h = h + jnp.dot(x_target, conv["w_r"], precision=hp)
        if i != num_layers - 1:
            h = jnp.maximum(h, 0.0)
        x = h
    log_probs = jax.nn.log_softmax(x, axis=-1)
    return log_probs, jnp.dot(x, x.T, precision=hp)


# --------------------------------- main ------------------------------------ #

if __name__ == "__main__":
    in_channels, hidden_channels, out_channels = 16, 32, 8
    n0, n1, n2 = 64, 32, 16          # src nodes L1, dst L1 (= src L2), dst L2
    e1, e2 = 256, 128                # edge counts per sampled layer

    key = jax.random.PRNGKey(0)
    keys = jax.random.split(key, 10)

    # node features
    x = jax.random.normal(keys[0], (n0, in_channels), dtype=jnp.float32)

    # synthetic sampled bipartite adjacencies: (edge_index, size=(n_src, n_dst))
    ei1 = jnp.stack([jax.random.randint(keys[1], (e1,), 0, n0),
                     jax.random.randint(keys[2], (e1,), 0, n1)]).astype(jnp.int32)
    ei2 = jnp.stack([jax.random.randint(keys[3], (e2,), 0, n1),
                     jax.random.randint(keys[4], (e2,), 0, n2)]).astype(jnp.int32)
    adjs = [(ei1, (n0, n1)), (ei2, (n1, n2))]

    # deterministic SAGEConv parameters (lin_l: bias, lin_r: no bias),
    # stored pre-transposed as (in, out)
    def make_conv(k, cin, cout):
        k1, k2, k3 = jax.random.split(k, 3)
        return {
            "w_l": 0.1 * jax.random.normal(k1, (cin, cout), dtype=jnp.float32),
            "b_l": 0.1 * jax.random.normal(k2, (1, cout), dtype=jnp.float32),
            "w_r": 0.1 * jax.random.normal(k3, (cin, cout), dtype=jnp.float32),
        }

    params = {"convs": [make_conv(keys[5], in_channels, hidden_channels),
                        make_conv(keys[6], hidden_channels, out_channels)]}

    log_probs, x_product = sage_forward(params, x, adjs)
    jax.block_until_ready((log_probs, x_product))

    # verify against a pure-JAX reference
    ref_lp, ref_prod = sage_forward_ref(params, x, adjs)
    assert log_probs.shape == (n2, out_channels) and x_product.shape == (n2, n2)
    assert jnp.allclose(log_probs, ref_lp, rtol=1e-2, atol=1e-2)
    assert jnp.allclose(x_product.astype(jnp.float32), ref_prod,
                        rtol=2e-2, atol=2e-2)   # decoder output is bf16

    print("KERNEL_OK")
</pallas_src>

<mosaic_0001>
module attributes {stable_mosaic.version = 11 : i64} {
  func.func @_sage_layer_kernel(%arg0: i32, %arg1: i32, %arg2: memref<32x128xi8, #tpu.memory_space<vmem>>, %arg3: memref<128x16xf32, #tpu.memory_space<vmem>>, %arg4: memref<32x16xf32, #tpu.memory_space<vmem>>, %arg5: memref<32x1xf32, #tpu.memory_space<vmem>>, %arg6: memref<16x32xf32, #tpu.memory_space<vmem>>, %arg7: memref<1x32xf32, #tpu.memory_space<vmem>>, %arg8: memref<16x32xf32, #tpu.memory_space<vmem>>, %arg9: memref<32x32xf32, #tpu.memory_space<vmem>>, %arg10: memref<32x16xf32, #tpu.memory_space<vmem>>) attributes {dimension_semantics = [#tpu.dimension_semantics<parallel>, #tpu.dimension_semantics<arbitrary>], iteration_bounds = array<i64: 1, 1>, scalar_prefetch = 0 : i64, scratch_operands = 1 : i64, tpu.core_type = #tpu.core_type<tc>, window_params = [{transform_indices = @transform_0, window_bounds = array<i64: 32, 128>}, {transform_indices = @transform_1, window_bounds = array<i64: 128, 16>}, {transform_indices = @transform_2, window_bounds = array<i64: 32, 16>}, {transform_indices = @transform_3, window_bounds = array<i64: 32, 1>}, {pipeline_mode = #tpu.pipeline_mode<synchronous>, transform_indices = @transform_4, window_bounds = array<i64: 16, 32>}, {pipeline_mode = #tpu.pipeline_mode<synchronous>, transform_indices = @transform_5, window_bounds = array<i64: 1, 32>}, {pipeline_mode = #tpu.pipeline_mode<synchronous>, transform_indices = @transform_6, window_bounds = array<i64: 16, 32>}, {transform_indices = @transform_7, window_bounds = array<i64: 32, 32>}]} {
    %c0_i32 = arith.constant 0 : i32
    %0 = arith.cmpi eq, %arg1, %c0_i32 : i32
    %1 = arith.extui %0 : i1 to i32
    %c0_i32_0 = arith.constant 0 : i32
    %2 = arith.cmpi ne, %1, %c0_i32_0 : i32
    scf.if %2 {
      %cst_10 = arith.constant 0.000000e+00 : f32
      %13 = vector.broadcast %cst_10 : f32 to vector<32x16xf32>
      %c0_11 = arith.constant 0 : index
      %c0_12 = arith.constant 0 : index
      %14 = vector.load %arg10[%c0_11, %c0_12] : memref<32x16xf32, #tpu.memory_space<vmem>>, vector<32x16xf32>
      tpu.vector_store %arg10[%c0_11, %c0_12], %13 {strides = array<i32>} : memref<32x16xf32, #tpu.memory_space<vmem>>, vector<32x16xf32>,
    } else {
    }
    %c0 = arith.constant 0 : index
    %c0_1 = arith.constant 0 : index
    %3 = vector.load %arg2[%c0, %c0_1] : memref<32x128xi8, #tpu.memory_space<vmem>>, vector<32x128xi8>
    %4 = arith.sitofp %3 : vector<32x128xi8> to vector<32x128xf32>
    %c0_2 = arith.constant 0 : index
    %c0_3 = arith.constant 0 : index
    %5 = vector.load %arg10[%c0_2, %c0_3] : memref<32x16xf32, #tpu.memory_space<vmem>>, vector<32x16xf32>
    %c0_4 = arith.constant 0 : index
    %c0_5 = arith.constant 0 : index
    %6 = vector.load %arg3[%c0_4, %c0_5] : memref<128x16xf32, #tpu.memory_space<vmem>>, vector<128x16xf32>
    %cst = arith.constant dense<0.000000e+00> : vector<32x16xf32>
    %7 = tpu.matmul %4, %6, %cst {dimension_numbers = #tpu.dot_dimension_numbers<[1], [0], [0], [1], [0, 0, 1, 1], [], []>} : vector<32x128xf32>, vector<128x16xf32>, vector<32x16xf32> -> vector<32x16xf32>
    %8 = arith.addf %5, %7 : vector<32x16xf32>
    %c0_6 = arith.constant 0 : index
    %c0_7 = arith.constant 0 : index
    %9 = vector.load %arg10[%c0_6, %c0_7] : memref<32x16xf32, #tpu.memory_space<vmem>>, vector<32x16xf32>
    tpu.vector_store %arg10[%c0_6, %c0_7], %8 {strides = array<i32>} : memref<32x16xf32, #tpu.memory_space<vmem>>, vector<32x16xf32>,
    %c0_i32_8 = arith.constant 0 : i32
    %10 = arith.cmpi eq, %arg1, %c0_i32_8 : i32
    %11 = arith.extui %10 : i1 to i32
    %c0_i32_9 = arith.constant 0 : i32
    %12 = arith.cmpi ne, %11, %c0_i32_9 : i32
    scf.if %12 {
      %c0_10 = arith.constant 0 : index
      %c0_11 = arith.constant 0 : index
      %13 = vector.load %arg10[%c0_10, %c0_11] : memref<32x16xf32, #tpu.memory_space<vmem>>, vector<32x16xf32>
      %c0_12 = arith.constant 0 : index
      %c0_13 = arith.constant 0 : index
      %14 = vector.load %arg5[%c0_12, %c0_13] : memref<32x1xf32, #tpu.memory_space<vmem>>, vector<32x1xf32>
      %15 = vector.broadcast %14 : vector<32x1xf32> to vector<32x16xf32>
      %16 = arith.mulf %13, %15 : vector<32x16xf32>
      %c0_14 = arith.constant 0 : index
      %c0_15 = arith.constant 0 : index
      %17 = vector.load %arg6[%c0_14, %c0_15] : memref<16x32xf32, #tpu.memory_space<vmem>>, vector<16x32xf32>
      %cst_16 = arith.constant dense<0.000000e+00> : vector<32x32xf32>
      %18 = tpu.matmul %16, %17, %cst_16 {dimension_numbers = #tpu.dot_dimension_numbers<[1], [0], [0], [1], [0, 0, 1, 1], [], []>} : vector<32x16xf32>, vector<16x32xf32>, vector<32x32xf32> -> vector<32x32xf32>
      %c0_17 = arith.constant 0 : index
      %c0_18 = arith.constant 0 : index
      %19 = vector.load %arg7[%c0_17, %c0_18] : memref<1x32xf32, #tpu.memory_space<vmem>>, vector<1x32xf32>
      %20 = vector.broadcast %19 : vector<1x32xf32> to vector<32x32xf32>
      %21 = arith.addf %18, %20 : vector<32x32xf32>
      %c0_19 = arith.constant 0 : index
      %c0_20 = arith.constant 0 : index
      %22 = vector.load %arg4[%c0_19, %c0_20] : memref<32x16xf32, #tpu.memory_space<vmem>>, vector<32x16xf32>
      %c0_21 = arith.constant 0 : index
      %c0_22 = arith.constant 0 : index
      %23 = vector.load %arg8[%c0_21, %c0_22] : memref<16x32xf32, #tpu.memory_space<vmem>>, vector<16x32xf32>
      %cst_23 = arith.constant dense<0.000000e+00> : vector<32x32xf32>
      %24 = tpu.matmul %22, %23, %cst_23 {dimension_numbers = #tpu.dot_dimension_numbers<[1], [0], [0], [1], [0, 0, 1, 1], [], []>} : vector<32x16xf32>, vector<16x32xf32>, vector<32x32xf32> -> vector<32x32xf32>
      %25 = arith.addf %21, %24 : vector<32x32xf32>
      %cst_24 = arith.constant 0.000000e+00 : f32
      %26 = vector.broadcast %cst_24 : f32 to vector<32x32xf32>
      %27 = arith.maximumf %25, %26 : vector<32x32xf32>
      %c0_25 = arith.constant 0 : index
      %c0_26 = arith.constant 0 : index
      %28 = vector.load %arg9[%c0_25, %c0_26] : memref<32x32xf32, #tpu.memory_space<vmem>>, vector<32x32xf32>
      tpu.vector_store %arg9[%c0_25, %c0_26], %27 {strides = array<i32>} : memref<32x32xf32, #tpu.memory_space<vmem>>, vector<32x32xf32>,
    } else {
    }
    return
  }
  func.func @transform_0(%arg0: i32, %arg1: i32) -> (i32, i32) {
    %c0_i32 = arith.constant 0 : i32
    return %arg0, %arg1 : i32, i32
  }
  func.func @transform_1(%arg0: i32, %arg1: i32) -> (i32, i32) {
    %c0_i32 = arith.constant 0 : i32
    %c0_i32_0 = arith.constant 0 : i32
    return %arg1, %c0_i32 : i32, i32
  }
  func.func @transform_2(%arg0: i32, %arg1: i32) -> (i32, i32) {
    %c0_i32 = arith.constant 0 : i32
    %c0_i32_0 = arith.constant 0 : i32
    return %arg0, %c0_i32 : i32, i32
  }
  func.func @transform_3(%arg0: i32, %arg1: i32) -> (i32, i32) {
    %c0_i32 = arith.constant 0 : i32
    %c0_i32_0 = arith.constant 0 : i32
    return %arg0, %c0_i32 : i32, i32
  }
  func.func @transform_4(%arg0: i32, %arg1: i32) -> (i32, i32) {
    %c0_i32 = arith.constant 0 : i32
    %c0_i32_0 = arith.constant 0 : i32
    %c0_i32_1 = arith.constant 0 : i32
    return %c0_i32, %c0_i32_0 : i32, i32
  }
  func.func @transform_5(%arg0: i32, %arg1: i32) -> (i32, i32) {
    %c0_i32 = arith.constant 0 : i32
    %c0_i32_0 = arith.constant 0 : i32
    %c0_i32_1 = arith.constant 0 : i32
    return %c0_i32, %c0_i32_0 : i32, i32
  }
  func.func @transform_6(%arg0: i32, %arg1: i32) -> (i32, i32) {
    %c0_i32 = arith.constant 0 : i32
    %c0_i32_0 = arith.constant 0 : i32
    %c0_i32_1 = arith.constant 0 : i32
    return %c0_i32, %c0_i32_0 : i32, i32
  }
  func.func @transform_7(%arg0: i32, %arg1: i32) -> (i32, i32) {
    %c0_i32 = arith.constant 0 : i32
    %c0_i32_0 = arith.constant 0 : i32
    return %arg0, %c0_i32 : i32, i32
  }
}

</mosaic_0001>

<llo_original>
// kernel: tpu_custom_call.1
$region0: #{tpu_custom_call.1}
  #allocation0 [shape = 'u32[]', space=smem, size = 0x4, offset = 0x4, fixed_abs, tag = 'smem constant byte address 0x4 - core index']
  #allocation1 [shape = 'u32[144,128]{1,0:T(1,128)}', space=vmem, size = 0x12000, scoped, tag = 'internal scratch']
  #allocation2 [shape = 'f32[32,16]{1,0:T(8,128)}', space=vmem, size = 0x4000, scoped, tag = 'scratch operand']
  %s0 = inlined_call_operand.vmem [shape: s8[32,128], index: 0, kind: input, shape index: {}]
  %s1 = inlined_call_operand.vmem [shape: f32[128,16], index: 1, kind: input, shape index: {}]
  %s2 = inlined_call_operand.vmem [shape: f32[32,16], index: 2, kind: input, shape index: {}]
  %s3 = inlined_call_operand.vmem [shape: f32[32,1], index: 3, kind: input, shape index: {}]
  %s4 = inlined_call_operand.vmem [shape: f32[16,32], index: 4, kind: input, shape index: {}]
  %s5 = inlined_call_operand.vmem [shape: f32[1,32], index: 5, kind: input, shape index: {}]
  %s6 = inlined_call_operand.vmem [shape: f32[16,32], index: 6, kind: input, shape index: {}]
  %s7 = inlined_call_operand.hbm [shape: f32[32,32], index: 7, kind: output, shape index: {}]
  %s8 = sld [smem:[#allocation0]]
  $region46: #{tpu_custom_call.1} parent=0
    _
  %s10 = ssub.s32 1, %s8
  %s11 = scalar_select 0, %s10, %s8
  $region1: #{tpu_custom_call.1} parent=0
    #allocation3 [shape = 'u8[16384]{0}', space=vmem, size = 0x4000, scoped, tag = 'output window, operand 0, single buffered']
    #allocation4 [shape = 's32[1]{0}', space=sflag, size = 0x4, scoped, tag = 'scoped memory for tpu_custom_call.1']
    %12 = vsyncpa [#allocation4], 0
    // Predicated region
    $region2: #{tpu_custom_call.1} parent=1 // pred_check
      _
    $region3: #{tpu_custom_call.1} parent=1 // pred_check_branch
      %14 = sbr.rel (0) target = $region5
    $region4: #{tpu_custom_call.1} parent=1 // pred_region
      _
    $region5: #{tpu_custom_call.1} parent=1 // pred_fallthru
      _
    // Predicated region
    $region6: #{tpu_custom_call.1} parent=1 // pred_check
      _
    $region7: #{tpu_custom_call.1} parent=1 // pred_check_branch
      %16 = sbr.rel (0) target = $region9
    $region8: #{tpu_custom_call.1} parent=1 // pred_region
      _
    $region9: #{tpu_custom_call.1} parent=1 // pred_fallthru
      _
    // Predicated region
    $region10: #{tpu_custom_call.1} parent=1 // pred_check
      _
    $region11: #{tpu_custom_call.1} parent=1 // pred_check_branch
      %18 = sbr.rel (0) target = $region13
    $region12: #{tpu_custom_call.1} parent=1 // pred_region
      _
    $region13: #{tpu_custom_call.1} parent=1 // pred_fallthru
      _
    // Predicated region
    $region14: #{tpu_custom_call.1} parent=1 // pred_check
      _
    $region15: #{tpu_custom_call.1} parent=1 // pred_check_branch
      %20 = sbr.rel (0) target = $region17
    $region16: #{tpu_custom_call.1} parent=1 // pred_region
      _
    $region17: #{tpu_custom_call.1} parent=1 // pred_fallthru
      _
    // Predicated region
    $region18: #{tpu_custom_call.1} parent=1 // pred_check
      _
    $region19: #{tpu_custom_call.1} parent=1 // pred_check_branch
      %22 = sbr.rel (0) target = $region21
    $region20: #{tpu_custom_call.1} parent=1 // pred_region
      _
    $region21: #{tpu_custom_call.1} parent=1 // pred_fallthru
      _
    // Predicated region
    $region22: #{tpu_custom_call.1} parent=1 // pred_check
      _
    $region23: #{tpu_custom_call.1} parent=1 // pred_check_branch
      %24 = sbr.rel (0) target = $region25
    $region24: #{tpu_custom_call.1} parent=1 // pred_region
      _
    $region25: #{tpu_custom_call.1} parent=1 // pred_fallthru
      _
    // Predicated region
    $region26: #{tpu_custom_call.1} parent=1 // pred_check
      _
    $region27: #{tpu_custom_call.1} parent=1 // pred_check_branch
      %26 = sbr.rel (0) target = $region29
    $region28: #{tpu_custom_call.1} parent=1 // pred_region
      _
    $region29: #{tpu_custom_call.1} parent=1 // pred_fallthru
      _
    %p27 = scmp.eq.s32.totalorder 0, 0
    // Predicated region
    $region30: #{tpu_custom_call.1} parent=1 // pred_check
      %p28 = pneg %p27
    $region31: #{tpu_custom_call.1} parent=1 // pred_check_branch
      %30 = sbr.rel (%p28) target = $region33
    $region32: #{tpu_custom_call.1} parent=1 // pred_region
      %vm31 = vcmask 130048
      %32 = vst.msk [vmem:[#allocation2] sm:$0xff] %vm31, 0.0
      %33 = vst.msk [vmem:[#allocation2 + $0x8] sm:$0xff] %vm31, 0.0
      %34 = vst.msk [vmem:[#allocation2 + $0x10] sm:$0xff] %vm31, 0.0
      %35 = vst.msk [vmem:[#allocation2 + $0x18] sm:$0xff] %vm31, 0.0
    $region33: #{tpu_custom_call.1} parent=1 // pred_fallthru
      _
    %v36 = vld [vmem:[%s0] sm:$0xff]
    %v37 = vunpack.c.0.s8 %v36
    %v38 = vunpack.c.1.s8 %v36
    %v39 = vunpack.c.2.s8 %v36
    %v40 = vunpack.c.3.s8 %v36
    %v41 = vcvt.s32.f32 %v37
    %v42 = vcvt.s32.f32 %v38
    %v43 = vcvt.s32.f32 %v39
    %v44 = vcvt.s32.f32 %v40
    %v45 = vld [vmem:[#allocation2] sm:$0xff]
    %v46 = vld [vmem:[#allocation2 + $0x8] sm:$0xff]
    %v47 = vld [vmem:[#allocation2 + $0x10] sm:$0xff]
    %v48 = vld [vmem:[#allocation2 + $0x18] sm:$0xff]
    %v49 = vld [vmem:[%s1] sm:$0xff]
    %v50 = vld [vmem:[%s1 + $0x8] sm:$0xff]
    %v51 = vld [vmem:[%s1 + $0x10] sm:$0xff]
    %v52 = vld [vmem:[%s1 + $0x18] sm:$0xff]
    %v53 = vld [vmem:[%s1 + $0x20] sm:$0xff]
    %v54 = vld [vmem:[%s1 + $0x28] sm:$0xff]
    %v55 = vld [vmem:[%s1 + $0x30] sm:$0xff]
    %v56 = vld [vmem:[%s1 + $0x38] sm:$0xff]
    %v57 = vld [vmem:[%s1 + $0x40] sm:$0xff]
    %v58 = vld [vmem:[%s1 + $0x48] sm:$0xff]
    %v59 = vld [vmem:[%s1 + $0x50] sm:$0xff]
    %v60 = vld [vmem:[%s1 + $0x58] sm:$0xff]
    %v61 = vld [vmem:[%s1 + $0x60] sm:$0xff]
    %v62 = vld [vmem:[%s1 + $0x68] sm:$0xff]
    %v63 = vld [vmem:[%s1 + $0x70] sm:$0xff]
    %v64 = vld [vmem:[%s1 + $0x78] sm:$0xff]
    %65 = vmatprep.subr.mxu0 0.0
    %66 = vmatpush1.msra.mxu0 %v64
    %67 = vmatprep.subr.mxu0 0.0
    %68 = vmatpush1.msra.mxu0 %v63
    %69 = vmatprep.subr.mxu0 0.0
    %70 = vmatpush1.msra.mxu0 %v62
    %71 = vmatprep.subr.mxu0 0.0
    %72 = vmatpush1.msra.mxu0 %v61
    %73 = vmatprep.subr.mxu0 0.0
    %74 = vmatpush1.msra.mxu0 %v60
    %75 = vmatprep.subr.mxu0 0.0
    %76 = vmatpush1.msra.mxu0 %v59
    %77 = vmatprep.subr.mxu0 0.0
    %78 = vmatpush1.msra.mxu0 %v58
    %79 = vmatprep.subr.mxu0 0.0
    %80 = vmatpush1.msra.mxu0 %v57
    %81 = vmatprep.subr.mxu0 0.0
    %82 = vmatpush1.msra.mxu0 %v56
    %83 = vmatprep.subr.mxu0 0.0
    %84 = vmatpush1.msra.mxu0 %v55
    %85 = vmatprep.subr.mxu0 0.0
    %86 = vmatpush1.msra.mxu0 %v54
    %87 = vmatprep.subr.mxu0 0.0
    %88 = vmatpush1.msra.mxu0 %v53
    %89 = vmatprep.subr.mxu0 0.0
    %90 = vmatpush1.msra.mxu0 %v52
    %91 = vmatprep.subr.mxu0 0.0
    %92 = vmatpush1.msra.mxu0 %v51
    %93 = vmatprep.subr.mxu0 0.0
    %94 = vmatpush1.msra.mxu0 %v50
    %95 = vmatprep.subr.mxu0 0.0
    %96 = vmatpush1.msra.mxu0 %v49
    %97 = vmatprep.subr.mxu0 0.0
    %98 = vmatpush2.msra.mxu0 0.0
    %99 = vmatprep.subr.mxu0 0.0
    %100 = vmatpush2.msra.mxu0 0.0
    %101 = vmatprep.subr.mxu0 0.0
    %102 = vmatpush2.msra.mxu0 0.0
    %103 = vmatprep.subr.mxu0 0.0
    %104 = vmatpush2.msra.mxu0 0.0
    %105 = vmatprep.subr.mxu0 0.0
    %106 = vmatpush2.msra.mxu0 0.0
    %107 = vmatprep.subr.mxu0 0.0
    %108 = vmatpush2.msra.mxu0 0.0
    %109 = vmatprep.subr.mxu0 0.0
    %110 = vmatpush2.msra.mxu0 0.0
    %111 = vmatprep.subr.mxu0 0.0
    %112 = vmatpush2.msra.mxu0 0.0
    %113 = vmatprep.subr.mxu0 0.0
    %114 = vmatpush2.msra.mxu0 0.0
    %115 = vmatprep.subr.mxu0 0.0
    %116 = vmatpush2.msra.mxu0 0.0
    %117 = vmatprep.subr.mxu0 0.0
    %118 = vmatpush2.msra.mxu0 0.0
    %119 = vmatprep.subr.mxu0 0.0
    %120 = vmatpush2.msra.mxu0 0.0
    %121 = vmatprep.subr.mxu0 0.0
    %122 = vmatpush2.msra.mxu0 0.0
    %123 = vmatprep.subr.mxu0 0.0
    %124 = vmatpush2.msra.mxu0 0.0
    %125 = vmatprep.subr.mxu0 0.0
    %126 = vmatpush2.msra.mxu0 0.0
    %127 = vmatprep.subr.mxu0 0.0
    %128 = vmatpush2.msra.mxu0 0.0
    %129 = vmatprep.mubr.f32.mxu0 0.0
    %130 = vmatmul.mubr.f32.gmra.mxu0 %v41
    %v131 = vpop.f32.mrf.mxu0
    %v132 = vadd.f32 0.0, %v131
    %v133 = vpop.f32.mrf.mxu0
    %134 = vmatprep.mubr.f32.mxu0 0.0
    %135 = vmatmul.mubr.f32.gmra.mxu0 %v42
    %v136 = vpop.f32.mrf.mxu0
    %v137 = vadd.f32 0.0, %v136
    %v138 = vpop.f32.mrf.mxu0
    %139 = vmatprep.mubr.f32.mxu0 0.0
    %140 = vmatmul.mubr.f32.gmra.mxu0 %v43
    %v141 = vpop.f32.mrf.mxu0
    %v142 = vadd.f32 0.0, %v141
    %v143 = vpop.f32.mrf.mxu0
    %144 = vmatprep.mubr.f32.mxu0 0.0
    %145 = vmatmul.mubr.f32.gmra.mxu0 %v44
    %v146 = vpop.f32.mrf.mxu0
    %v147 = vadd.f32 0.0, %v146
    %v148 = vpop.f32.mrf.mxu0
    %149 = vdwg.mxu0
    %v150 = vadd.f32 %v45, %v132
    %v151 = vadd.f32 %v46, %v137
    %v152 = vadd.f32 %v47, %v142
    %v153 = vadd.f32 %v48, %v147
    %vm154 = vcmask 130048
    %155 = vst.msk [vmem:[#allocation2] sm:$0xff] %vm154, %v150
    %156 = vst.msk [vmem:[#allocation2 + $0x8] sm:$0xff] %vm154, %v151
    %157 = vst.msk [vmem:[#allocation2 + $0x10] sm:$0xff] %vm154, %v152
    %158 = vst.msk [vmem:[#allocation2 + $0x18] sm:$0xff] %vm154, %v153
    // Predicated region
    $region34: #{tpu_custom_call.1} parent=1 // pred_check
      %p159 = pneg %p27
    $region35: #{tpu_custom_call.1} parent=1 // pred_check_branch
      %161 = sbr.rel (%p159) target = $region37
    $region36: #{tpu_custom_call.1} parent=1 // pred_region
      %v162 = vld [vmem:[#allocation2] sm:$0xff]
      %v163 = vld [vmem:[#allocation2 + $0x8] sm:$0xff]
      %v164 = vld [vmem:[#allocation2 + $0x10] sm:$0xff]
      %v165 = vld [vmem:[#allocation2 + $0x18] sm:$0xff]
      %v166 = vld [vmem:[%s3] sm:$0xff]
      %v167 = vld [vmem:[%s3 + $0x8] sm:$0xff]
      %v168 = vld [vmem:[%s3 + $0x10] sm:$0xff]
      %v169 = vld [vmem:[%s3 + $0x18] sm:$0xff]
      %171 = vset.pattern.permute.xlu0 0
      %172 = vperm.xlu0 %171, %v166
      %v173 = vpop.permute.xlu0 %172
      %176 = vset.pattern.permute.xlu0 0
      %177 = vperm.xlu0 %176, %v167
      %v178 = vpop.permute.xlu0 %177
      %181 = vset.pattern.permute.xlu0 0
      %182 = vperm.xlu0 %181, %v168
      %v183 = vpop.permute.xlu0 %182
      %186 = vset.pattern.permute.xlu0 0
      %187 = vperm.xlu0 %186, %v169
      %v188 = vpop.permute.xlu0 %187
      %v190 = vmul.f32 %v162, %v173
      %v191 = vmul.f32 %v163, %v178
      %v192 = vmul.f32 %v164, %v183
      %v193 = vmul.f32 %v165, %v188
      %v194 = vld [vmem:[%s4] sm:$0xff]
      %v195 = vld [vmem:[%s4 + $0x8] sm:$0xff]
      %v196 = vld [vmem:[%s5] sm:$0x1]
      %v198 = vlaneseq
      %v199 = vshrl.u32 %v198, 7
      %v200 = vsub.s32 0, %v199
      %v201 = vrot.slane %v196, %v200
      %v204 = vsel %vm154, %v190, 0
      %v207 = vsel %vm154, %v191, 0
      %v210 = vsel %vm154, %v192, 0
      %v213 = vsel %vm154, %v193, 0
      %215 = vmatprep.subr.mxu0 0.0
      %216 = vmatpush1.msra.mxu0 0.0
      %217 = vmatprep.subr.mxu0 0.0
      %218 = vmatpush1.msra.mxu0 0.0
      %219 = vmatprep.subr.mxu0 0.0
      %220 = vmatpush1.msra.mxu0 0.0
      %221 = vmatprep.subr.mxu0 0.0
      %222 = vmatpush1.msra.mxu0 0.0
      %223 = vmatprep.subr.mxu0 0.0
      %224 = vmatpush1.msra.mxu0 0.0
      %225 = vmatprep.subr.mxu0 0.0
      %226 = vmatpush1.msra.mxu0 0.0
      %227 = vmatprep.subr.mxu0 0.0
      %228 = vmatpush1.msra.mxu0 0.0
      %229 = vmatprep.subr.mxu0 0.0
      %230 = vmatpush1.msra.mxu0 0.0
      %231 = vmatprep.subr.mxu0 0.0
      %232 = vmatpush1.msra.mxu0 0.0
      %233 = vmatprep.subr.mxu0 0.0
      %234 = vmatpush1.msra.mxu0 0.0
      %235 = vmatprep.subr.mxu0 0.0
      %236 = vmatpush1.msra.mxu0 0.0
      %237 = vmatprep.subr.mxu0 0.0
      %238 = vmatpush1.msra.mxu0 0.0
      %239 = vmatprep.subr.mxu0 0.0
      %240 = vmatpush1.msra.mxu0 0.0
      %241 = vmatprep.subr.mxu0 0.0
      %242 = vmatpush1.msra.mxu0 0.0
      %243 = vmatprep.subr.mxu0 0.0
      %244 = vmatpush1.msra.mxu0 %v195
      %245 = vmatprep.subr.mxu0 0.0
      %246 = vmatpush1.msra.mxu0 %v194
      %247 = vmatprep.subr.mxu0 0.0
      %248 = vmatpush2.msra.mxu0 0.0
      %249 = vmatprep.subr.mxu0 0.0
      %250 = vmatpush2.msra.mxu0 0.0
      %251 = vmatprep.subr.mxu0 0.0
      %252 = vmatpush2.msra.mxu0 0.0
      %253 = vmatprep.subr.mxu0 0.0
      %254 = vmatpush2.msra.mxu0 0.0
      %255 = vmatprep.subr.mxu0 0.0
      %256 = vmatpush2.msra.mxu0 0.0
      %257 = vmatprep.subr.mxu0 0.0
      %258 = vmatpush2.msra.mxu0 0.0
      %259 = vmatprep.subr.mxu0 0.0
      %260 = vmatpush2.msra.mxu0 0.0
      %261 = vmatprep.subr.mxu0 0.0
      %262 = vmatpush2.msra.mxu0 0.0
      %263 = vmatprep.subr.mxu0 0.0
      %264 = vmatpush2.msra.mxu0 0.0
      %265 = vmatprep.subr.mxu0 0.0
      %266 = vmatpush2.msra.mxu0 0.0
      %267 = vmatprep.subr.mxu0 0.0
      %268 = vmatpush2.msra.mxu0 0.0
      %269 = vmatprep.subr.mxu0 0.0
      %270 = vmatpush2.msra.mxu0 0.0
      %271 = vmatprep.subr.mxu0 0.0
      %272 = vmatpush2.msra.mxu0 0.0
      %273 = vmatprep.subr.mxu0 0.0
      %274 = vmatpush2.msra.mxu0 0.0
      %275 = vmatprep.subr.mxu0 0.0
      %276 = vmatpush2.msra.mxu0 0.0
      %277 = vmatprep.subr.mxu0 0.0
      %278 = vmatpush2.msra.mxu0 0.0
      %279 = vmatprep.mubr.f32.mxu0 0.0
      %280 = vmatmul.mubr.f32.gmra.mxu0 %v204
      %v281 = vpop.f32.mrf.mxu0
      %v282 = vadd.f32 %v201, %v281
      %v283 = vpop.f32.mrf.mxu0
      %284 = vmatprep.mubr.f32.mxu0 0.0
      %285 = vmatmul.mubr.f32.gmra.mxu0 %v207
      %v286 = vpop.f32.mrf.mxu0
      %v287 = vadd.f32 %v201, %v286
      %v288 = vpop.f32.mrf.mxu0
      %289 = vmatprep.mubr.f32.mxu0 0.0
      %290 = vmatmul.mubr.f32.gmra.mxu0 %v210
      %v291 = vpop.f32.mrf.mxu0
      %v292 = vadd.f32 %v201, %v291
      %v293 = vpop.f32.mrf.mxu0
      %294 = vmatprep.mubr.f32.mxu0 0.0
      %295 = vmatmul.mubr.f32.gmra.mxu0 %v213
      %v296 = vpop.f32.mrf.mxu0
      %v297 = vadd.f32 %v201, %v296
      %v298 = vpop.f32.mrf.mxu0
      %299 = vdwg.mxu0
      %v300 = vld [vmem:[%s2] sm:$0xff]
      %v301 = vld [vmem:[%s2 + $0x8] sm:$0xff]
      %v302 = vld [vmem:[%s2 + $0x10] sm:$0xff]
      %v303 = vld [vmem:[%s2 + $0x18] sm:$0xff]
      %v304 = vld [vmem:[%s6] sm:$0xff]
      %v305 = vld [vmem:[%s6 + $0x8] sm:$0xff]
      %v307 = vsel %vm154, %v300, 0
      %v310 = vsel %vm154, %v301, 0
      %v313 = vsel %vm154, %v302, 0
      %v316 = vsel %vm154, %v303, 0
      %318 = vmatprep.subr.mxu0 0.0
      %319 = vmatpush1.msra.mxu0 0.0
      %320 = vmatprep.subr.mxu0 0.0
      %321 = vmatpush1.msra.mxu0 0.0
      %322 = vmatprep.subr.mxu0 0.0
      %323 = vmatpush1.msra.mxu0 0.0
      %324 = vmatprep.subr.mxu0 0.0
      %325 = vmatpush1.msra.mxu0 0.0
      %326 = vmatprep.subr.mxu0 0.0
      %327 = vmatpush1.msra.mxu0 0.0
      %328 = vmatprep.subr.mxu0 0.0
      %329 = vmatpush1.msra.mxu0 0.0
      %330 = vmatprep.subr.mxu0 0.0
      %331 = vmatpush1.msra.mxu0 0.0
      %332 = vmatprep.subr.mxu0 0.0
      %333 = vmatpush1.msra.mxu0 0.0
      %334 = vmatprep.subr.mxu0 0.0
      %335 = vmatpush1.msra.mxu0 0.0
      %336 = vmatprep.subr.mxu0 0.0
      %337 = vmatpush1.msra.mxu0 0.0
      %338 = vmatprep.subr.mxu0 0.0
      %339 = vmatpush1.msra.mxu0 0.0
      %340 = vmatprep.subr.mxu0 0.0
      %341 = vmatpush1.msra.mxu0 0.0
      %342 = vmatprep.subr.mxu0 0.0
      %343 = vmatpush1.msra.mxu0 0.0
      %344 = vmatprep.subr.mxu0 0.0
      %345 = vmatpush1.msra.mxu0 0.0
      %346 = vmatprep.subr.mxu0 0.0
      %347 = vmatpush1.msra.mxu0 %v305
      %348 = vmatprep.subr.mxu0 0.0
      %349 = vmatpush1.msra.mxu0 %v304
      %350 = vmatprep.subr.mxu0 0.0
      %351 = vmatpush2.msra.mxu0 0.0
      %352 = vmatprep.subr.mxu0 0.0
      %353 = vmatpush2.msra.mxu0 0.0
      %354 = vmatprep.subr.mxu0 0.0
      %355 = vmatpush2.msra.mxu0 0.0
      %356 = vmatprep.subr.mxu0 0.0
      %357 = vmatpush2.msra.mxu0 0.0
      %358 = vmatprep.subr.mxu0 0.0
      %359 = vmatpush2.msra.mxu0 0.0
      %360 = vmatprep.subr.mxu0 0.0
      %361 = vmatpush2.msra.mxu0 0.0
      %362 = vmatprep.subr.mxu0 0.0
      %363 = vmatpush2.msra.mxu0 0.0
      %364 = vmatprep.subr.mxu0 0.0
      %365 = vmatpush2.msra.mxu0 0.0
      %366 = vmatprep.subr.mxu0 0.0
      %367 = vmatpush2.msra.mxu0 0.0
      %368 = vmatprep.subr.mxu0 0.0
      %369 = vmatpush2.msra.mxu0 0.0
      %370 = vmatprep.subr.mxu0 0.0
      %371 = vmatpush2.msra.mxu0 0.0
      %372 = vmatprep.subr.mxu0 0.0
      %373 = vmatpush2.msra.mxu0 0.0
      %374 = vmatprep.subr.mxu0 0.0
      %375 = vmatpush2.msra.mxu0 0.0
      %376 = vmatprep.subr.mxu0 0.0
      %377 = vmatpush2.msra.mxu0 0.0
      %378 = vmatprep.subr.mxu0 0.0
      %379 = vmatpush2.msra.mxu0 0.0
      %380 = vmatprep.subr.mxu0 0.0
      %381 = vmatpush2.msra.mxu0 0.0
      %382 = vmatprep.mubr.f32.mxu0 0.0
      %383 = vmatmul.mubr.f32.gmra.mxu0 %v307
      %v384 = vpop.f32.mrf.mxu0
      %v385 = vadd.f32 0.0, %v384
      %v386 = vpop.f32.mrf.mxu0
      %387 = vmatprep.mubr.f32.mxu0 0.0
      %388 = vmatmul.mubr.f32.gmra.mxu0 %v310
      %v389 = vpop.f32.mrf.mxu0
      %v390 = vadd.f32 0.0, %v389
      %v391 = vpop.f32.mrf.mxu0
      %392 = vmatprep.mubr.f32.mxu0 0.0
      %393 = vmatmul.mubr.f32.gmra.mxu0 %v313
      %v394 = vpop.f32.mrf.mxu0
      %v395 = vadd.f32 0.0, %v394
      %v396 = vpop.f32.mrf.mxu0
      %397 = vmatprep.mubr.f32.mxu0 0.0
      %398 = vmatmul.mubr.f32.gmra.mxu0 %v316
      %v399 = vpop.f32.mrf.mxu0
      %v400 = vadd.f32 0.0, %v399
      %v401 = vpop.f32.mrf.mxu0
      %402 = vdwg.mxu0
      %v403 = vadd.f32 %v282, %v385
      %v404 = vadd.f32 %v287, %v390
      %v405 = vadd.f32 %v292, %v395
      %v406 = vadd.f32 %v297, %v400
      %v407 = vmax.f32 %v403, 0.0
      %v408 = vmax.f32 %v404, 0.0
      %v409 = vmax.f32 %v405, 0.0
      %v410 = vmax.f32 %v406, 0.0
      %vm411 = vcmask 261120
      %412 = vst.msk [vmem:[#allocation3] sm:$0xff] %vm411, %v407
      %413 = vst.msk [vmem:[#allocation3 + $0x8] sm:$0xff] %vm411, %v408
      %414 = vst.msk [vmem:[#allocation3 + $0x10] sm:$0xff] %vm411, %v409
      %415 = vst.msk [vmem:[#allocation3 + $0x18] sm:$0xff] %vm411, %v410
    $region37: #{tpu_custom_call.1} parent=1 // pred_fallthru
      _
    // Predicated region
    $region38: #{tpu_custom_call.1} parent=1 // pred_check
      _
    $region39: #{tpu_custom_call.1} parent=1 // pred_check_branch
      %417 = sbr.rel (0) target = $region41
    $region40: #{tpu_custom_call.1} parent=1 // pred_region
      %s419 = ssub.s32 512, 512
      %420 = vsyncadd [#allocation4], %s419
      %s421 = sshll.u32 [#allocation3], 4
      %s422 = int_to_ptr.vmem [resolvable:$true] %s421
      %427 = dma.vmem_to_hbm [thread:$0]  %s422, 512, %s7, [#allocation4], 128, 128, 8
    $region41: #{tpu_custom_call.1} parent=1 // pred_fallthru
      _
    // Predicated region
    $region42: #{tpu_custom_call.1} parent=1 // pred_check
      _
    $region43: #{tpu_custom_call.1} parent=1 // pred_check_branch
      %429 = sbr.rel (0) target = $region45
    $region44: #{tpu_custom_call.1} parent=1 // pred_region
      %430 = dma.done [#allocation4], 512
    $region45: #{tpu_custom_call.1} parent=1 // pred_fallthru
      _
    %431 = vsyncpa [#allocation4], 1

</llo_original>
